<compile_context>
chip_gen: v5e
topology: v5e:2x2
jax: 0.10.0
libtpu: 0.0.40
codegen_flags: <defaults>
</compile_context>

<pallas_src>
import numpy as np
import jax
import jax.numpy as jnp
from jax.experimental import pallas as pl
from jax.experimental.pallas import tpu as pltpu


# ----------------------------------------------------------------------------
# Static constants (derived from the module's buffers; exact for qubits == 4,
# the only size where the module's buffer shapes are consistent).
#   const[:, 0:Q]   = shift_tab  (pi/2 where factor contributes cos, else 0)
#   const[:, Q]     = Re[(-i)^{n_sin(r)}]
#   const[:, Q + 1] = Im[(-i)^{n_sin(r)}]
# ----------------------------------------------------------------------------
def build_constants(qubits):
    assert qubits == 4, "RX module's buffers only line up for qubits == 4"
    Q = qubits
    D = 2 ** Q
    half = Q // 2
    const = np.zeros((D, Q + 2), np.float32)
    minus_i_pow = [(1.0, 0.0), (0.0, -1.0), (-1.0, 0.0), (0.0, 1.0)]
    for r in range(D):
        n_sin = 0
        for k in range(Q):
            bit = (r >> k) & 1
            is_cos = (bit == 0) if k < half else (bit == 1)
            const[r, k] = np.pi / 2 if is_cos else 0.0
            n_sin += 0 if is_cos else 1
        const[r, Q], const[r, Q + 1] = minus_i_pow[n_sin % 4]
    return const


# ----------------------------------------------------------------------------
# Pallas kernel + jitted wrapper
# ----------------------------------------------------------------------------
def make_rx_apply(qubits):
    Q = qubits
    D = 2 ** Q
    const = jnp.asarray(build_constants(qubits))          # (D, Q+2) f32, static

    def kernel(const_ref, w_ref, xr_ref, xi_ref, o_ref):
        M = xr_ref.shape[1]
        # vals[r, k] = sin(w[k]/2 + shift_tab[r, k])  -> cos(w/2) or sin(w/2)
        vals = jnp.sin(0.5 * w_ref[...] + const_ref[:, 0:Q])        # (D, Q)  EUP

        # product over the Q factors (Q static & tiny -> unrolled VPU multiplies)
        mag = vals[:, 0:1]                                           # (D, 1)
        for k in range(1, Q):
            mag = mag * vals[:, k:k + 1]

        u_re = mag * const_ref[:, Q:Q + 1]                           # (D, 1)
        u_im = mag * const_ref[:, Q + 1:Q + 2]                       # (D, 1)

        s_re = jnp.sum(xr_ref[...], axis=0, keepdims=True)           # (1, M)
        s_im = jnp.sum(xi_ref[...], axis=0, keepdims=True)           # (1, M)

        # (unitary @ x)[r, m] = u[r] * sum_c x[c, m]   (all columns of U equal u)
        out_re = u_re * s_re - u_im * s_im                           # (D, M)
        out_im = u_re * s_im + u_im * s_re                           # (D, M)

        # single full-tile store: [re | im] packed along lanes
        o_ref[...] = jnp.concatenate([out_re, out_im], axis=-1)      # (D, 2M)

    @jax.jit
    def apply(weight, x):
        """weight: (Q,) f32; x: (D, M) complex64; returns unitary @ x, (D, M) c64."""
        M = x.shape[-1]
        xr = jnp.real(x).astype(jnp.float32)                         # (D, M)
        xi = jnp.imag(x).astype(jnp.float32)                         # (D, M)
        w_row = weight.reshape(1, Q).astype(jnp.float32)             # (1, Q)

        vmem = pl.BlockSpec(memory_space=pltpu.MemorySpace.VMEM)
        packed = pl.pallas_call(
            kernel,
            out_shape=jax.ShapeDtypeStruct((D, 2 * M), jnp.float32),
            in_specs=[vmem, vmem, vmem, vmem],
            out_specs=vmem,
        )(const, w_row, xr, xi)

        return jax.lax.complex(packed[:, :M], packed[:, M:])         # (D, M) c64

    return apply


# ----------------------------------------------------------------------------
# Pure-numpy reference: literal transcription of the torch forward.
# ----------------------------------------------------------------------------
def rx_reference_np(weight, x, qubits):
    q = qubits
    half = q // 2
    w = np.asarray(weight, dtype=np.float64)
    shift = np.kron(np.pi / 2 * np.eye(half), np.ones((1, q)))
    signer = np.kron(np.array([[1, -1j], [-1j, 1]]), np.ones((1, q)))
    pattern = np.ones((half, half))
    scale = np.kron((w / 2.0).reshape(1, q), pattern)
    w_scale = np.sin(scale + shift).astype(np.complex128)
    w_scale = signer * w_scale
    unitary = w_scale[:, -2:]
    for i in range(1, q):
        idx = -2 * i
        unitary = np.kron(unitary, w_scale[:, idx - 2:idx])
    return unitary @ x


if __name__ == "__main__":
    QUBITS = 4            # module's buffer shapes require qubits == 4
    D = 2 ** QUBITS       # 16
    M = 8                 # number of state columns applied at once

    key = jax.random.PRNGKey(0)
    kw, kr, ki = jax.random.split(key, 3)
    weight = jax.random.normal(kw, (QUBITS,), dtype=jnp.float32)      # nn.Parameter
    x_re = jax.random.normal(kr, (D, M), dtype=jnp.float32)
    x_im = jax.random.normal(ki, (D, M), dtype=jnp.float32)
    x = (x_re + 1j * x_im).astype(jnp.complex64)

    rx_apply = make_rx_apply(QUBITS)
    out = jax.block_until_ready(rx_apply(weight, x))

    ref = rx_reference_np(np.asarray(weight), np.asarray(x).astype(np.complex128), QUBITS)
    err = float(np.max(np.abs(np.asarray(out) - ref)))
    assert out.shape == (D, M) and out.dtype == jnp.complex64
    assert err < 1e-4, f"max abs error too large: {err}"
    print("KERNEL_OK")
</pallas_src>

<mosaic_0001>
module attributes {stable_mosaic.version = 11 : i64} {
  func.func @kernel(%arg0: memref<16x6xf32, #tpu.memory_space<vmem>>, %arg1: memref<1x4xf32, #tpu.memory_space<vmem>>, %arg2: memref<16x8xf32, #tpu.memory_space<vmem>>, %arg3: memref<16x8xf32, #tpu.memory_space<vmem>>, %arg4: memref<16x16xf32, #tpu.memory_space<vmem>>) attributes {dimension_semantics = [], scalar_prefetch = 0 : i64, scratch_operands = 0 : i64, tpu.core_type = #tpu.core_type<tc>} {
    %c0 = arith.constant 0 : index
    %c0_0 = arith.constant 0 : index
    %0 = vector.load %arg1[%c0, %c0_0] : memref<1x4xf32, #tpu.memory_space<vmem>>, vector<1x4xf32>
    %cst = arith.constant 5.000000e-01 : f32
    %1 = vector.broadcast %cst : f32 to vector<1x4xf32>
    %2 = arith.mulf %1, %0 : vector<1x4xf32>
    %c0_1 = arith.constant 0 : index
    %c0_2 = arith.constant 0 : index
    %3 = vector.load %arg0[%c0_1, %c0_2] : memref<16x6xf32, #tpu.memory_space<vmem>>, vector<16x4xf32>
    %4 = vector.broadcast %2 : vector<1x4xf32> to vector<16x4xf32>
    %5 = arith.addf %4, %3 : vector<16x4xf32>
    %6 = math.sin %5 : vector<16x4xf32>
    %7 = vector.extract_strided_slice %6 {offsets = [0, 0], sizes = [16, 1], strides = [1, 1]} : vector<16x4xf32> to vector<16x1xf32>
    %8 = vector.extract_strided_slice %6 {offsets = [0, 1], sizes = [16, 1], strides = [1, 1]} : vector<16x4xf32> to vector<16x1xf32>
    %9 = arith.mulf %7, %8 : vector<16x1xf32>
    %10 = vector.extract_strided_slice %6 {offsets = [0, 2], sizes = [16, 1], strides = [1, 1]} : vector<16x4xf32> to vector<16x1xf32>
    %11 = arith.mulf %9, %10 : vector<16x1xf32>
    %12 = vector.extract_strided_slice %6 {offsets = [0, 3], sizes = [16, 1], strides = [1, 1]} : vector<16x4xf32> to vector<16x1xf32>
    %13 = arith.mulf %11, %12 : vector<16x1xf32>
    %c0_3 = arith.constant 0 : index
    %c4 = arith.constant 4 : index
    %14 = vector.load %arg0[%c0_3, %c4] : memref<16x6xf32, #tpu.memory_space<vmem>>, vector<16x1xf32>
    %15 = arith.mulf %13, %14 : vector<16x1xf32>
    %c0_4 = arith.constant 0 : index
    %c5 = arith.constant 5 : index
    %16 = vector.load %arg0[%c0_4, %c5] : memref<16x6xf32, #tpu.memory_space<vmem>>, vector<16x1xf32>
    %17 = arith.mulf %13, %16 : vector<16x1xf32>
    %c0_5 = arith.constant 0 : index
    %c0_6 = arith.constant 0 : index
    %18 = vector.load %arg2[%c0_5, %c0_6] : memref<16x8xf32, #tpu.memory_space<vmem>>, vector<16x8xf32>
    %cst_7 = arith.constant dense<0.000000e+00> : vector<8xf32>
    %19 = vector.multi_reduction <add>, %18, %cst_7 [0] : vector<16x8xf32> to vector<8xf32>
    %20 = vector.shape_cast %19 : vector<8xf32> to vector<1x8xf32>
    %c0_8 = arith.constant 0 : index
    %c0_9 = arith.constant 0 : index
    %21 = vector.load %arg3[%c0_8, %c0_9] : memref<16x8xf32, #tpu.memory_space<vmem>>, vector<16x8xf32>
    %cst_10 = arith.constant dense<0.000000e+00> : vector<8xf32>
    %22 = vector.multi_reduction <add>, %21, %cst_10 [0] : vector<16x8xf32> to vector<8xf32>
    %23 = vector.shape_cast %22 : vector<8xf32> to vector<1x8xf32>
    %24 = vector.broadcast %15 : vector<16x1xf32> to vector<16x8xf32>
    %25 = vector.broadcast %20 : vector<1x8xf32> to vector<16x8xf32>
    %26 = arith.mulf %24, %25 : vector<16x8xf32>
    %27 = vector.broadcast %17 : vector<16x1xf32> to vector<16x8xf32>
    %28 = vector.broadcast %23 : vector<1x8xf32> to vector<16x8xf32>
    %29 = arith.mulf %27, %28 : vector<16x8xf32>
    %30 = arith.subf %26, %29 : vector<16x8xf32>
    %31 = vector.broadcast %15 : vector<16x1xf32> to vector<16x8xf32>
    %32 = vector.broadcast %23 : vector<1x8xf32> to vector<16x8xf32>
    %33 = arith.mulf %31, %32 : vector<16x8xf32>
    %34 = vector.broadcast %17 : vector<16x1xf32> to vector<16x8xf32>
    %35 = vector.broadcast %20 : vector<1x8xf32> to vector<16x8xf32>
    %36 = arith.mulf %34, %35 : vector<16x8xf32>
    %37 = arith.addf %33, %36 : vector<16x8xf32>
    %38 = tpu.concatenate %30, %37 in 1 : vector<16x8xf32>, vector<16x8xf32> -> vector<16x16xf32>
    %c0_11 = arith.constant 0 : index
    %c0_12 = arith.constant 0 : index
    %39 = vector.load %arg4[%c0_11, %c0_12] : memref<16x16xf32, #tpu.memory_space<vmem>>, vector<16x16xf32>
    tpu.vector_store %arg4[%c0_11, %c0_12], %38 {strides = array<i32>} : memref<16x16xf32, #tpu.memory_space<vmem>>, vector<16x16xf32>,
    return
  }
}

</mosaic_0001>

<llo_original>
// kernel: custom-call.1
$region0: #{custom-call.1}
  %s0 = inlined_call_operand.vmem [shape: c64[16,8], index: 0, kind: input, shape index: {}]
  %s1 = inlined_call_operand.vmem [shape: f32[16,8], index: 1, kind: output, shape index: {}]
  %s2 = scalar_lea.vmem %s0, 16
  %v3 = vld [vmem:[%s2] sm:$0xff]
  %4 = vst [vmem:[%s1] sm:$0xff] %v3
  %s5 = scalar_lea.vmem %s1, 8
  %s6 = scalar_lea.vmem %s2, 8
  %v7 = vld [vmem:[%s6] sm:$0xff]
  %8 = vst [vmem:[%s5] sm:$0xff] %v7

// kernel: custom-call
$region0: #{custom-call}
  %s0 = inlined_call_operand.vmem [shape: c64[16,8], index: 0, kind: input, shape index: {}]
  %s1 = inlined_call_operand.vmem [shape: f32[16,8], index: 1, kind: output, shape index: {}]
  %v2 = vld [vmem:[%s0] sm:$0xff]
  %3 = vst [vmem:[%s1] sm:$0xff] %v2
  %s4 = scalar_lea.vmem %s1, 8
  %s5 = scalar_lea.vmem %s0, 8
  %v6 = vld [vmem:[%s5] sm:$0xff]
  %7 = vst [vmem:[%s4] sm:$0xff] %v6

// kernel: custom-call.2
$region0: #{custom-call.2}
  %s0 = inlined_call_operand.vmem [shape: f32[16,8], index: 0, kind: input, shape index: {}]
  %s1 = inlined_call_operand.vmem [shape: f32[16,8], index: 1, kind: input, shape index: {}]
  %s2 = inlined_call_operand.vmem [shape: c64[16,8], index: 2, kind: output, shape index: {}]
  %s3 = scalar_lea.vmem %s2, 16
  %v4 = vld [vmem:[%s0] sm:$0xff]
  %5 = vst [vmem:[%s2] sm:$0xff] %v4
  %s6 = scalar_lea.vmem %s2, 8
  %s7 = scalar_lea.vmem %s0, 8
  %v8 = vld [vmem:[%s7] sm:$0xff]
  %9 = vst [vmem:[%s6] sm:$0xff] %v8
  %v10 = vld [vmem:[%s1] sm:$0xff]
  %11 = vst [vmem:[%s3] sm:$0xff] %v10
  %s12 = scalar_lea.vmem %s3, 8
  %s13 = scalar_lea.vmem %s1, 8
  %v14 = vld [vmem:[%s13] sm:$0xff]
  %15 = vst [vmem:[%s12] sm:$0xff] %v14

// kernel: apply.1
$region0: #{apply.1}
  #allocation0 [shape = 'u32[]', space=smem, size = 0x4, offset = 0x4, fixed_abs, tag = 'smem constant byte address 0x4 - core index']
  #allocation1 [shape = 'u32[72,128]{1,0:T(1,128)}', space=vmem, size = 0x9000, scoped, tag = 'internal scratch']
  %s0 = inlined_call_operand.vmem [shape: f32[16,6], index: 0, kind: input, shape index: {}]
  %s1 = inlined_call_operand.vmem [shape: f32[1,4], index: 1, kind: input, shape index: {}]
  %s2 = inlined_call_operand.vmem [shape: f32[16,8], index: 2, kind: input, shape index: {}]
  %s3 = inlined_call_operand.vmem [shape: f32[16,8], index: 3, kind: input, shape index: {}]
  %s4 = inlined_call_operand.vmem [shape: f32[16,16], index: 4, kind: output, shape index: {}]
  %s5 = sld [smem:[#allocation0]]
  $region26: #{apply.1} parent=0
    _
  %s7 = ssub.s32 1, %s5
  %s8 = scalar_select 0, %s7, %s5
  // Predicated region
  $region2: #{apply.1} parent=0 // pred_check
    _
  $region3: #{apply.1} parent=0 // pred_check_branch
    %10 = sbr.rel (0) target = $region5
  $region4: #{apply.1} parent=0 // pred_region
    _
  $region5: #{apply.1} parent=0 // pred_fallthru
    _
  // Predicated region
  $region6: #{apply.1} parent=0 // pred_check
    _
  $region7: #{apply.1} parent=0 // pred_check_branch
    %12 = sbr.rel (0) target = $region9
  $region8: #{apply.1} parent=0 // pred_region
    _
  $region9: #{apply.1} parent=0 // pred_fallthru
    _
  // Predicated region
  $region10: #{apply.1} parent=0 // pred_check
    _
  $region11: #{apply.1} parent=0 // pred_check_branch
    %14 = sbr.rel (0) target = $region13
  $region12: #{apply.1} parent=0 // pred_region
    _
  $region13: #{apply.1} parent=0 // pred_fallthru
    _
  // Predicated region
  $region14: #{apply.1} parent=0 // pred_check
    _
  $region15: #{apply.1} parent=0 // pred_check_branch
    %16 = sbr.rel (0) target = $region17
  $region16: #{apply.1} parent=0 // pred_region
    _
  $region17: #{apply.1} parent=0 // pred_fallthru
    _
  %v17 = vld [vmem:[%s1] sm:$0x1]
  %v18 = vmul.f32 %v17, 0.5
  %v19 = vld [vmem:[%s0] sm:$0xff]
  %v20 = vld [vmem:[%s0 + $0x8] sm:$0xff]
  %v22 = vperm.slane %v18, 0
  %v24 = vadd.f32 %v22, %v19
  %v25 = vadd.f32 %v22, %v20
  %v26 = vand.u32 2147483647, %v24
  %vm27 = vcmp.le.f32.partialorder %v26, 0.7853982
  %vm28 = vcmp.lt.s32.totalorder %v24, 0
  %v29 = vand.u32 %v24, 2139095040
  %v30 = vshrl.u32 %v29, 23
  %v31 = vsub.s32 %v30, 127
  %v32 = vand.u32 2147483647, %v24
  %v33 = vand.u32 %v32, 8388607
  %v34 = vor.u32 %v33, 8388608
  %v35 = vsub.s32 0, %v34
  %v36 = vadd.s32 %v31, 1
  %vm37 = vcmp.gt.s32.totalorder %v36, 0
  %v38 = vsel %vm37, %v36, 0
  %v39 = vshrl.u32 %v38, 5
  %v40 = vand.u32 %v38, 31
  %v41 = vsub.s32 32, %v40
  %v42 = vshrl.u32 683565275, %v41
  %v43 = vshll.u32 683565275, %v40
  %v44 = vshrl.u32 2475754826, %v41
  %v45 = vor.u32 %v43, %v44
  %v46 = vshll.u32 2475754826, %v40
  %v47 = vshrl.u32 2131351028, %v41
  %v48 = vor.u32 %v46, %v47
  %v49 = vshll.u32 2131351028, %v40
  %v50 = vshrl.u32 2102212464, %v41
  %v51 = vor.u32 %v49, %v50
  %v52 = vshll.u32 2102212464, %v40
  %v53 = vshrl.u32 920167782, %v41
  %v54 = vor.u32 %v52, %v53
  %v55 = vshll.u32 920167782, %v40
  %v56 = vshrl.u32 1326507024, %v41
  %v57 = vor.u32 %v55, %v56
  %vm58 = vcmp.lt.s32.totalorder %v39, 1
  %vm59 = vcmp.lt.s32.totalorder %v39, 2
  %vm60 = vcmp.lt.s32.totalorder %v39, 3
  %vm61 = vcmp.lt.s32.totalorder %v39, 4
  %v62 = vsel %vm58, %v42, %v45
  %v63 = vsel %vm61, %v51, 2102212464
  %v64 = vsel %vm60, %v48, %v63
  %v65 = vsel %vm59, %v62, %v64
  %v66 = vsel %vm58, %v45, %v48
  %v67 = vsel %vm61, %v54, 920167782
  %v68 = vsel %vm60, %v51, %v67
  %v69 = vsel %vm59, %v66, %v68
  %v70 = vsel %vm58, %v48, %v51
  %v71 = vsel %vm61, %v57, 1326507024
  %v72 = vsel %vm60, %v54, %v71
  %v73 = vsel %vm59, %v70, %v72
  %v74 = vshll.u32 %v34, 8
  %v75 = vand.u32 %v74, 65535
  %v76 = vshrl.u32 %v74, 16
  %v77 = vand.u32 %v73, 65535
  %v78 = vshrl.u32 %v73, 16
  %v79 = vmul.u32 %v75, %v77
  %v80 = vmul.u32 %v75, %v78
  %v81 = vmul.u32 %v76, %v77
  %v82 = vmul.u32 %v76, %v78
  %v83 = vshll.u32 %v80, 16
  %v84 = vshrl.u32 %v80, 16
  %v85 = vshll.u32 %v81, 16
  %v86 = vshrl.u32 %v81, 16
  %vm87 = vc.u32 %v79, %v83
  %v88 = vsel %vm87, 1, 0
  %v89 = vadd.s32 %v79, %v83
  %v90 = vadd.s32 %v82, %v88
  %vm91 = vc.u32 %v89, %v85
  %v92 = vsel %vm91, 1, 0
  %v93 = vadd.s32 %v89, %v85
  %v94 = vadd.s32 %v90, %v92
  %v95 = vadd.s32 %v94, %v84
  %v96 = vadd.s32 %v95, %v86
  %v97 = vand.u32 %v74, 65535
  %v98 = vshrl.u32 %v74, 16
  %v99 = vand.u32 %v69, 65535
  %v100 = vshrl.u32 %v69, 16
  %v101 = vmul.u32 %v97, %v99
  %v102 = vmul.u32 %v97, %v100
  %v103 = vmul.u32 %v98, %v99
  %v104 = vmul.u32 %v98, %v100
  %v105 = vshll.u32 %v102, 16
  %v106 = vshrl.u32 %v102, 16
  %v107 = vshll.u32 %v103, 16
  %v108 = vshrl.u32 %v103, 16
  %vm109 = vc.u32 %v101, %v105
  %v110 = vsel %vm109, 1, 0
  %v111 = vadd.s32 %v101, %v105
  %v112 = vadd.s32 %v104, %v110
  %vm113 = vc.u32 %v111, %v107
  %v114 = vsel %vm113, 1, 0
  %v115 = vadd.s32 %v111, %v107
  %v116 = vadd.s32 %v112, %v114
  %v117 = vadd.s32 %v116, %v106
  %v118 = vadd.s32 %v117, %v108
  %v119 = vmul.u32 %v74, %v65
  %v120 = vadd.s32 %v96, %v115
  %vm121 = vc.u32 %v96, %v115
  %v122 = vadd.s32 %v118, 1
  %v123 = vsel %vm121, %v122, %v118
  %v124 = vadd.s32 %v119, %v123
  %v125 = vadd.s32 %v124, 536870912
  %v126 = vshrl.u32 %v125, 30
  %v127 = vshll.u32 %v126, 30
  %v128 = vsub.s32 %v124, %v127
  %vm129 = vcmp.lt.s32.totalorder %v128, 0
  %v130 = vsub.s32 0, %v128
  %v131 = vsel %vm129, %v130, %v128
  %v132 = vclz %v131
  %v133 = vsub.s32 %v132, 2
  %vm134 = vcmp.gt.s32.totalorder 0, %v133
  %v135 = vsel %vm134, 0, %v133
  %v136 = vsub.s32 32, %v135
  %v137 = vshll.u32 %v128, %v135
  %v138 = vshrl.u32 %v120, %v136
  %v139 = vor.u32 %v137, %v138
  %v140 = vsub.s32 4294967266, %v135
  %v141 = vadd.s32 %v140, 127
  %v142 = vshll.u32 %v141, 23
  %v143 = vor.u32 4788187, %v142
  %v144 = vand.u32 2147483647, %v143
  %v146 = vcvt.s32.f32 %v139
  %v147 = vmul.f32 %v146, %v144
  %v148 = vxor.u32 %v147, 2147483648
  %v149 = vsel %vm28, %v148, %v147
  %v150 = vsub.s32 4, %v126
  %v151 = vsel %vm28, %v150, %v126
  %v152 = vsel %vm27, %v24, %v149
  %v153 = vsel %vm27, 0, %v151
  %v154 = vmul.f32 %v152, %v152
  %v155 = vmul.f32 %v154, -0.001358992
  %v156 = vadd.f32 %v155, 0.041655596
  %v157 = vmul.f32 %v154, %v156
  %v158 = vadd.f32 %v157, -0.4999988
  %v159 = vmul.f32 %v154, %v158
  %v160 = vadd.f32 1.0, %v159
  %v161 = vmul.f32 %v152, %v152
  %v162 = vmul.f32 %v161, -0.00019511016
  %v163 = vadd.f32 %v162, 0.008332121
  %v164 = vmul.f32 %v161, %v163
  %v165 = vadd.f32 %v164, -0.16666654
  %v166 = vmul.f32 %v161, %v165
  %v167 = vadd.f32 %v166, 1.0
  %v168 = vmul.f32 %v167, %v152
  %vm169 = vweird.f32 %v24
  %v170 = vadd.s32 %v153, 3
  %v171 = vand.u32 %v170, 3
  %vm172 = vcmp.lt.s32.totalorder %v171, 2
  %vm173 = vcmp.eq.s32.totalorder %v171, 0
  %v174 = vxor.u32 %v168, 2147483648
  %v175 = vsel %vm173, %v160, %v174
  %vm176 = vcmp.eq.s32.totalorder %v171, 2
  %v177 = vxor.u32 %v160, 2147483648
  %v178 = vsel %vm176, %v177, %v168
  %v179 = vsel %vm172, %v175, %v178
  %v180 = vsel %vm169, nan, %v179
  %v181 = vand.u32 2147483647, %v25
  %vm182 = vcmp.le.f32.partialorder %v181, 0.7853982
  %vm183 = vcmp.lt.s32.totalorder %v25, 0
  %v184 = vand.u32 %v25, 2139095040
  %v185 = vshrl.u32 %v184, 23
  %v186 = vsub.s32 %v185, 127
  %v187 = vand.u32 2147483647, %v25
  %v188 = vand.u32 %v187, 8388607
  %v189 = vor.u32 %v188, 8388608
  %v190 = vsub.s32 0, %v189
  %v191 = vadd.s32 %v186, 1
  %vm192 = vcmp.gt.s32.totalorder %v191, 0
  %v193 = vsel %vm192, %v191, 0
  %v194 = vshrl.u32 %v193, 5
  %v195 = vand.u32 %v193, 31
  %v196 = vsub.s32 32, %v195
  %v197 = vshrl.u32 683565275, %v196
  %v198 = vshll.u32 683565275, %v195
  %v199 = vshrl.u32 2475754826, %v196
  %v200 = vor.u32 %v198, %v199
  %v201 = vshll.u32 2475754826, %v195
  %v202 = vshrl.u32 2131351028, %v196
  %v203 = vor.u32 %v201, %v202
  %v204 = vshll.u32 2131351028, %v195
  %v205 = vshrl.u32 2102212464, %v196
  %v206 = vor.u32 %v204, %v205
  %v207 = vshll.u32 2102212464, %v195
  %v208 = vshrl.u32 920167782, %v196
  %v209 = vor.u32 %v207, %v208
  %v210 = vshll.u32 920167782, %v195
  %v211 = vshrl.u32 1326507024, %v196
  %v212 = vor.u32 %v210, %v211
  %vm213 = vcmp.lt.s32.totalorder %v194, 1
  %vm214 = vcmp.lt.s32.totalorder %v194, 2
  %vm215 = vcmp.lt.s32.totalorder %v194, 3
  %vm216 = vcmp.lt.s32.totalorder %v194, 4
  %v217 = vsel %vm213, %v197, %v200
  %v218 = vsel %vm216, %v206, 2102212464
  %v219 = vsel %vm215, %v203, %v218
  %v220 = vsel %vm214, %v217, %v219
  %v221 = vsel %vm213, %v200, %v203
  %v222 = vsel %vm216, %v209, 920167782
  %v223 = vsel %vm215, %v206, %v222
  %v224 = vsel %vm214, %v221, %v223
  %v225 = vsel %vm213, %v203, %v206
  %v226 = vsel %vm216, %v212, 1326507024
  %v227 = vsel %vm215, %v209, %v226
  %v228 = vsel %vm214, %v225, %v227
  %v229 = vshll.u32 %v189, 8
  %v230 = vand.u32 %v229, 65535
  %v231 = vshrl.u32 %v229, 16
  %v232 = vand.u32 %v228, 65535
  %v233 = vshrl.u32 %v228, 16
  %v234 = vmul.u32 %v230, %v232
  %v235 = vmul.u32 %v230, %v233
  %v236 = vmul.u32 %v231, %v232
  %v237 = vmul.u32 %v231, %v233
  %v238 = vshll.u32 %v235, 16
  %v239 = vshrl.u32 %v235, 16
  %v240 = vshll.u32 %v236, 16
  %v241 = vshrl.u32 %v236, 16
  %vm242 = vc.u32 %v234, %v238
  %v243 = vsel %vm242, 1, 0
  %v244 = vadd.s32 %v234, %v238
  %v245 = vadd.s32 %v237, %v243
  %vm246 = vc.u32 %v244, %v240
  %v247 = vsel %vm246, 1, 0
  %v248 = vadd.s32 %v244, %v240
  %v249 = vadd.s32 %v245, %v247
  %v250 = vadd.s32 %v249, %v239
  %v251 = vadd.s32 %v250, %v241
  %v252 = vand.u32 %v229, 65535
  %v253 = vshrl.u32 %v229, 16
  %v254 = vand.u32 %v224, 65535
  %v255 = vshrl.u32 %v224, 16
  %v256 = vmul.u32 %v252, %v254
  %v257 = vmul.u32 %v252, %v255
  %v258 = vmul.u32 %v253, %v254
  %v259 = vmul.u32 %v253, %v255
  %v260 = vshll.u32 %v257, 16
  %v261 = vshrl.u32 %v257, 16
  %v262 = vshll.u32 %v258, 16
  %v263 = vshrl.u32 %v258, 16
  %vm264 = vc.u32 %v256, %v260
  %v265 = vsel %vm264, 1, 0
  %v266 = vadd.s32 %v256, %v260
  %v267 = vadd.s32 %v259, %v265
  %vm268 = vc.u32 %v266, %v262
  %v269 = vsel %vm268, 1, 0
  %v270 = vadd.s32 %v266, %v262
  %v271 = vadd.s32 %v267, %v269
  %v272 = vadd.s32 %v271, %v261
  %v273 = vadd.s32 %v272, %v263
  %v274 = vmul.u32 %v229, %v220
  %v275 = vadd.s32 %v251, %v270
  %vm276 = vc.u32 %v251, %v270
  %v277 = vadd.s32 %v273, 1
  %v278 = vsel %vm276, %v277, %v273
  %v279 = vadd.s32 %v274, %v278
  %v280 = vadd.s32 %v279, 536870912
  %v281 = vshrl.u32 %v280, 30
  %v282 = vshll.u32 %v281, 30
  %v283 = vsub.s32 %v279, %v282
  %vm284 = vcmp.lt.s32.totalorder %v283, 0
  %v285 = vsub.s32 0, %v283
  %v286 = vsel %vm284, %v285, %v283
  %v287 = vclz %v286
  %v288 = vsub.s32 %v287, 2
  %vm289 = vcmp.gt.s32.totalorder 0, %v288
  %v290 = vsel %vm289, 0, %v288
  %v291 = vsub.s32 32, %v290
  %v292 = vshll.u32 %v283, %v290
  %v293 = vshrl.u32 %v275, %v291
  %v294 = vor.u32 %v292, %v293
  %v295 = vsub.s32 4294967266, %v290
  %v296 = vadd.s32 %v295, 127
  %v297 = vshll.u32 %v296, 23
  %v298 = vor.u32 4788187, %v297
  %v299 = vand.u32 2147483647, %v298
  %v301 = vcvt.s32.f32 %v294
  %v302 = vmul.f32 %v301, %v299
  %v303 = vxor.u32 %v302, 2147483648
  %v304 = vsel %vm183, %v303, %v302
  %v305 = vsub.s32 4, %v281
  %v306 = vsel %vm183, %v305, %v281
  %v307 = vsel %vm182, %v25, %v304
  %v308 = vsel %vm182, 0, %v306
  %v309 = vmul.f32 %v307, %v307
  %v310 = vmul.f32 %v309, -0.001358992
  %v311 = vadd.f32 %v310, 0.041655596
  %v312 = vmul.f32 %v309, %v311
  %v313 = vadd.f32 %v312, -0.4999988
  %v314 = vmul.f32 %v309, %v313
  %v315 = vadd.f32 1.0, %v314
  %v316 = vmul.f32 %v307, %v307
  %v317 = vmul.f32 %v316, -0.00019511016
  %v318 = vadd.f32 %v317, 0.008332121
  %v319 = vmul.f32 %v316, %v318
  %v320 = vadd.f32 %v319, -0.16666654
  %v321 = vmul.f32 %v316, %v320
  %v322 = vadd.f32 %v321, 1.0
  %v323 = vmul.f32 %v322, %v307
  %vm324 = vweird.f32 %v25
  %v325 = vadd.s32 %v308, 3
  %v326 = vand.u32 %v325, 3
  %vm327 = vcmp.lt.s32.totalorder %v326, 2
  %vm328 = vcmp.eq.s32.totalorder %v326, 0
  %v329 = vxor.u32 %v323, 2147483648
  %v330 = vsel %vm328, %v315, %v329
  %vm331 = vcmp.eq.s32.totalorder %v326, 2
  %v332 = vxor.u32 %v315, 2147483648
  %v333 = vsel %vm331, %v332, %v323
  %v334 = vsel %vm327, %v330, %v333
  %v335 = vsel %vm324, nan, %v334
  %338 = vrot.lane.b32.xlu0 %v180, 127
  %v339 = vpop.permute.xlu0 %338
  %340 = vrot.lane.b32.xlu0 %v335, 127
  %v341 = vpop.permute.xlu0 %340
  %v344 = vmul.f32 %v180, %v339
  %v345 = vmul.f32 %v335, %v341
  %346 = vrot.lane.b32.xlu0 %v180, 126
  %v347 = vpop.permute.xlu0 %346
  %348 = vrot.lane.b32.xlu0 %v335, 126
  %v349 = vpop.permute.xlu0 %348
  %v352 = vmul.f32 %v344, %v347
  %v353 = vmul.f32 %v345, %v349
  %354 = vrot.lane.b32.xlu0 %v180, 125
  %v355 = vpop.permute.xlu0 %354
  %356 = vrot.lane.b32.xlu0 %v335, 125
  %v357 = vpop.permute.xlu0 %356
  %v360 = vmul.f32 %v352, %v355
  %v361 = vmul.f32 %v353, %v357
  %364 = vrot.lane.b32.xlu0 %v19, 124
  %v365 = vpop.permute.xlu0 %364
  %366 = vrot.lane.b32.xlu0 %v20, 124
  %v367 = vpop.permute.xlu0 %366
  %v370 = vmul.f32 %v360, %v365
  %v371 = vmul.f32 %v361, %v367
  %372 = vrot.lane.b32.xlu0 %v19, 123
  %v373 = vpop.permute.xlu0 %372
  %374 = vrot.lane.b32.xlu0 %v20, 123
  %v375 = vpop.permute.xlu0 %374
  %v378 = vmul.f32 %v360, %v373
  %v379 = vmul.f32 %v361, %v375
  %v380 = vld [vmem:[%s2] sm:$0xff]
  %v381 = vld [vmem:[%s2 + $0x8] sm:$0xff]
  %vm382 = vcmask 64512
  %v383 = vsel %vm382, %v380, 0.0
  %v384 = vsel %vm382, %v381, 0.0
  %v385 = vadd.f32 %v383, %v384
  %v386 = vrot.slane %v385, 4
  %v387 = vadd.f32 %v385, %v386
  %v388 = vrot.slane %v387, 2
  %v389 = vadd.f32 %v387, %v388
  %v390 = vrot.slane %v389, 1
  %v391 = vadd.f32 %v389, %v390
  %v392 = vld [vmem:[%s3] sm:$0xff]
  %v393 = vld [vmem:[%s3 + $0x8] sm:$0xff]
  %v394 = vsel %vm382, %v392, 0.0
  %v395 = vsel %vm382, %v393, 0.0
  %v396 = vadd.f32 %v394, %v395
  %v397 = vrot.slane %v396, 4
  %v398 = vadd.f32 %v396, %v397
  %v399 = vrot.slane %v398, 2
  %v400 = vadd.f32 %v398, %v399
  %v401 = vrot.slane %v400, 1
  %v402 = vadd.f32 %v400, %v401
  %404 = vset.pattern.permute.xlu0 0
  %405 = vperm.xlu0 %404, %v370
  %v406 = vpop.permute.xlu0 %405
  %409 = vset.pattern.permute.xlu0 0
  %410 = vperm.xlu0 %409, %v371
  %v411 = vpop.permute.xlu0 %410
  %v413 = vmul.f32 %v406, %v391
  %v414 = vmul.f32 %v411, %v391
  %416 = vset.pattern.permute.xlu0 0
  %417 = vperm.xlu0 %416, %v378
  %v418 = vpop.permute.xlu0 %417
  %421 = vset.pattern.permute.xlu0 0
  %422 = vperm.xlu0 %421, %v379
  %v423 = vpop.permute.xlu0 %422
  %v425 = vmul.f32 %v418, %v402
  %v426 = vmul.f32 %v423, %v402
  %v427 = vsub.f32 %v413, %v425
  %v428 = vsub.f32 %v414, %v426
  %v429 = vmul.f32 %v406, %v402
  %v430 = vmul.f32 %v411, %v402
  %v431 = vmul.f32 %v418, %v391
  %v432 = vmul.f32 %v423, %v391
  %v433 = vadd.f32 %v429, %v431
  %v434 = vadd.f32 %v430, %v432
  %437 = vrot.lane.b32.xlu0 %v433, 8
  %v438 = vpop.permute.xlu0 %437
  %439 = vrot.lane.b32.xlu0 %v434, 8
  %v440 = vpop.permute.xlu0 %439
  %v443 = vsel %vm382, %v427, %v438
  %v444 = vsel %vm382, %v428, %v440
  %vm445 = vcmask 130048
  %446 = vst.msk [vmem:[%s4] sm:$0xff] %vm445, %v443
  %447 = vst.msk [vmem:[%s4 + $0x8] sm:$0xff] %vm445, %v444
  // Predicated region
  $region18: #{apply.1} parent=0 // pred_check
    _
  $region19: #{apply.1} parent=0 // pred_check_branch
    %449 = sbr.rel (0) target = $region21
  $region20: #{apply.1} parent=0 // pred_region
    _
  $region21: #{apply.1} parent=0 // pred_fallthru
    _
  // Predicated region
  $region22: #{apply.1} parent=0 // pred_check
    _
  $region23: #{apply.1} parent=0 // pred_check_branch
    %451 = sbr.rel (0) target = $region25
  $region24: #{apply.1} parent=0 // pred_region
    _
  $region25: #{apply.1} parent=0 // pred_fallthru
    _

</llo_original>
